<compile_context>
chip_gen: v6e
topology: v6e:2x2x1
jax: 0.10.0
libtpu: 0.0.40
codegen_flags: <defaults>
</compile_context>

<pallas_src>
import functools
import math

import jax
import jax.numpy as jnp
from jax.experimental import pallas as pl
from jax.experimental.pallas import tpu as pltpu


def _ffn_kernel(x_ref, w1_ref, b1_ref, w2_ref, b2_ref, g_ref, beta_ref, o_ref,
                *, hidden_real, compute_dtype):
    x_in = x_ref[...]                                             # [tm, Hp] f32
    x_f32 = x_in.astype(jnp.float32)

    # intermediate: Linear(H -> H/2) on the MXU (bf16 in, f32 accumulate)
    h = jnp.dot(x_in.astype(compute_dtype), w1_ref[...],
                preferred_element_type=jnp.float32)
    h = h + b1_ref[...]
    # exact GELU (erf form) to match nn.GELU()
    h = 0.5 * h * (1.0 + jax.lax.erf(h * (1.0 / math.sqrt(2.0))))

    # output: Linear(H/2 -> H); dropout is identity in eval mode
    y = jnp.dot(h.astype(compute_dtype), w2_ref[...],
                preferred_element_type=jnp.float32)
    y = y + b2_ref[...]

    # residual add + LayerNorm(eps=1e-12) over the real hidden dim.
    # Padded lanes of x and y are exactly zero, so one-pass sums over Hp are correct.
    z = y + x_f32
    inv_h = 1.0 / float(hidden_real)
    s1 = jnp.sum(z, axis=-1, keepdims=True)
    s2 = jnp.sum(z * z, axis=-1, keepdims=True)
    mean = s1 * inv_h
    var = jnp.maximum(s2 * inv_h - mean * mean, 0.0)
    zn = (z - mean) * jax.lax.rsqrt(var + 1e-12)
    out = zn * g_ref[...] + beta_ref[...]

    o_ref[...] = out.astype(o_ref.dtype)


def _round_up(x, m):
    return (x + m - 1) // m * m


def _vmem_capacity_bytes():
    """Physical VMEM of the attached chip; conservative default if the query fails."""
    try:
        return int(pltpu.get_tpu_info().vmem_capacity_bytes)
    except Exception:
        return 64 * 1024 * 1024   # v7x-safe lower bound


def _footprint_bytes(tm, Hp, Ip, wbytes, x_itemsize):
    io = 2 * 2 * tm * Hp * x_itemsize               # x + out tiles, double-buffered
    scratch = tm * (4 * Hp + 2 * Ip) * 4            # in-kernel f32/bf16 temporaries
    vec = 4 * max(Hp, Ip) * 4 * 4                   # biases / gamma / beta
    return wbytes + io + scratch + vec


def feed_forward_layer(hidden_states, params, *, tm=None,
                       compute_dtype=jnp.bfloat16, single_buffer_weights=True):
    """hidden_states: [batch, seq, hidden] float32."""
    w1, b1, w2, b2, gamma, beta = params
    B, S, H = hidden_states.shape
    I = H // 2
    assert w1.shape == (H, I) and w2.shape == (I, H)

    tokens = B * S
    Hp = _round_up(H, 128)                    # lane-dense hidden
    Ip = _round_up(I, 128)                    # lane-dense intermediate

    # Resident-weight footprint (single-buffered).
    wbytes = (Hp * Ip + Ip * Hp) * jnp.dtype(compute_dtype).itemsize
    if not single_buffer_weights:
        wbytes *= 2

    # Auto-pick the largest token tile that keeps the full footprint within a
    # conservative share of physical VMEM (valid on v5e/v6e/v7x).
    vmem_cap = _vmem_capacity_bytes()
    budget = int(0.70 * vmem_cap)
    if tm is None:
        tm = 8
        for cand in (1024, 512, 256, 128, 64, 32, 16, 8):
            if _footprint_bytes(cand, Hp, Ip, wbytes,
                                hidden_states.dtype.itemsize) <= budget:
                tm = cand
                break
    tm_eff = _round_up(min(tm, _round_up(tokens, 8)), 8)
    tokens_p = _round_up(tokens, tm_eff)

    x2d = hidden_states.reshape(tokens, H)
    x2d = jnp.pad(x2d, ((0, tokens_p - tokens), (0, Hp - H)))

    def pad2(a, r, c):
        return jnp.pad(a, ((0, r - a.shape[0]), (0, c - a.shape[1])))

    # Weights stored in bf16 in HBM; vectors stay f32.
    w1p = pad2(w1, Hp, Ip).astype(compute_dtype)
    w2p = pad2(w2, Ip, Hp).astype(compute_dtype)
    b1p = pad2(b1.reshape(1, I), 1, Ip).astype(jnp.float32)
    b2p = pad2(b2.reshape(1, H), 1, Hp).astype(jnp.float32)
    gp = pad2(gamma.reshape(1, H), 1, Hp).astype(jnp.float32)
    bp = pad2(beta.reshape(1, H), 1, Hp).astype(jnp.float32)

    grid = (tokens_p // tm_eff,)

    footprint = _footprint_bytes(tm_eff, Hp, Ip, wbytes, hidden_states.dtype.itemsize)
    vmem_limit = int(min(max(footprint + (2 << 20), 32 * 1024 * 1024),
                         int(0.90 * vmem_cap)))

    kernel = functools.partial(_ffn_kernel, hidden_real=H, compute_dtype=compute_dtype)

    def build(single_buf):
        def const_spec(shape):
            # Constant-index blocks: single-buffer so they live in VMEM exactly once.
            if single_buf:
                return pl.BlockSpec(shape, lambda i: (0, 0),
                                    pipeline_mode=pl.Buffered(1))
            return pl.BlockSpec(shape, lambda i: (0, 0))

        return pl.pallas_call(
            kernel,
            out_shape=jax.ShapeDtypeStruct((tokens_p, Hp), hidden_states.dtype),
            grid_spec=pltpu.PrefetchScalarGridSpec(
                num_scalar_prefetch=0,
                grid=grid,
                in_specs=[
                    pl.BlockSpec((tm_eff, Hp), lambda i: (i, 0)),   # x tile
                    const_spec((Hp, Ip)),                           # W1
                    const_spec((1, Ip)),                            # b1
                    const_spec((Ip, Hp)),                           # W2
                    const_spec((1, Hp)),                            # b2
                    const_spec((1, Hp)),                            # gamma
                    const_spec((1, Hp)),                            # beta
                ],
                out_specs=pl.BlockSpec((tm_eff, Hp), lambda i: (i, 0)),
            ),
            compiler_params=pltpu.CompilerParams(
                dimension_semantics=("parallel",),
                vmem_limit_bytes=vmem_limit,
            ),
        )

    try:
        out = build(single_buffer_weights)(x2d, w1p, b1p, w2p, b2p, gp, bp)
    except Exception:
        # Fallback if single-buffered pipeline_mode is unsupported in this build.
        out = build(False)(x2d, w1p, b1p, w2p, b2p, gp, bp)

    return out[:tokens, :H].reshape(B, S, H)


def init_params(key, hidden_size):
    """Deterministic parameter init mirroring nn.Linear / nn.LayerNorm shapes."""
    H = hidden_size
    I = H // 2
    k1, k2, k3, k4 = jax.random.split(key, 4)
    # nn.Linear default: U(-1/sqrt(fan_in), 1/sqrt(fan_in))
    lim1 = 1.0 / math.sqrt(H)
    lim2 = 1.0 / math.sqrt(I)
    w1 = jax.random.uniform(k1, (H, I), jnp.float32, -lim1, lim1)   # = torch W1.T
    b1 = jax.random.uniform(k2, (1, I), jnp.float32, -lim1, lim1)
    w2 = jax.random.uniform(k3, (I, H), jnp.float32, -lim2, lim2)   # = torch W2.T
    b2 = jax.random.uniform(k4, (1, H), jnp.float32, -lim2, lim2)
    gamma = jnp.ones((1, H), jnp.float32)                            # LayerNorm weight
    beta = jnp.zeros((1, H), jnp.float32)                            # LayerNorm bias
    return (w1, b1, w2, b2, gamma, beta)


def _reference(hidden_states, params, compute_dtype=jnp.bfloat16):
    """Pure-JAX reference with the same bf16-matmul / f32-accumulate semantics."""
    w1, b1, w2, b2, gamma, beta = params
    x = hidden_states.astype(jnp.float32)
    h = jnp.dot(x.astype(compute_dtype), w1.astype(compute_dtype),
                preferred_element_type=jnp.float32) + b1
    h = 0.5 * h * (1.0 + jax.lax.erf(h / math.sqrt(2.0)))
    y = jnp.dot(h.astype(compute_dtype), w2.astype(compute_dtype),
                preferred_element_type=jnp.float32) + b2
    z = y + x
    mean = jnp.mean(z, axis=-1, keepdims=True)
    var = jnp.mean((z - mean) ** 2, axis=-1, keepdims=True)
    zn = (z - mean) * jax.lax.rsqrt(var + 1e-12)
    return zn * gamma + beta


if __name__ == "__main__":
    key = jax.random.PRNGKey(0)
    k_x, k_p = jax.random.split(key)

    batch, seq, hidden = 2, 8, 32
    x = jax.random.normal(k_x, (batch, seq, hidden), jnp.float32)
    params = init_params(k_p, hidden)

    out = feed_forward_layer(x, params)
    out = jax.block_until_ready(out)

    ref = _reference(x, params)
    assert out.shape == (batch, seq, hidden)
    max_err = float(jnp.max(jnp.abs(out - ref)))
    assert jnp.allclose(out, ref, atol=1e-3, rtol=1e-3), \
        f"mismatch vs reference (max abs err {max_err})"

    print("KERNEL_OK")
</pallas_src>

<mosaic_0001>
module attributes {stable_mosaic.version = 11 : i64} {
  func.func @_ffn_kernel(%arg0: i32, %arg1: memref<16x128xf32, #tpu.memory_space<vmem>>, %arg2: memref<128x128xbf16, #tpu.memory_space<vmem>>, %arg3: memref<1x128xf32, #tpu.memory_space<vmem>>, %arg4: memref<128x128xbf16, #tpu.memory_space<vmem>>, %arg5: memref<1x128xf32, #tpu.memory_space<vmem>>, %arg6: memref<1x128xf32, #tpu.memory_space<vmem>>, %arg7: memref<1x128xf32, #tpu.memory_space<vmem>>, %arg8: memref<16x128xf32, #tpu.memory_space<vmem>>) attributes {dimension_semantics = [#tpu.dimension_semantics<parallel>], iteration_bounds = array<i64: 1>, scalar_prefetch = 0 : i64, scratch_operands = 0 : i64, tpu.core_type = #tpu.core_type<tc>, window_params = [{transform_indices = @transform_0, window_bounds = array<i64: 16, 128>}, {pipeline_mode = #tpu.pipeline_mode<synchronous>, transform_indices = @transform_1, window_bounds = array<i64: 128, 128>}, {pipeline_mode = #tpu.pipeline_mode<synchronous>, transform_indices = @transform_2, window_bounds = array<i64: 1, 128>}, {pipeline_mode = #tpu.pipeline_mode<synchronous>, transform_indices = @transform_3, window_bounds = array<i64: 128, 128>}, {pipeline_mode = #tpu.pipeline_mode<synchronous>, transform_indices = @transform_4, window_bounds = array<i64: 1, 128>}, {pipeline_mode = #tpu.pipeline_mode<synchronous>, transform_indices = @transform_5, window_bounds = array<i64: 1, 128>}, {pipeline_mode = #tpu.pipeline_mode<synchronous>, transform_indices = @transform_6, window_bounds = array<i64: 1, 128>}, {transform_indices = @transform_7, window_bounds = array<i64: 16, 128>}]} {
    %c0 = arith.constant 0 : index
    %c0_0 = arith.constant 0 : index
    %0 = vector.load %arg1[%c0, %c0_0] : memref<16x128xf32, #tpu.memory_space<vmem>>, vector<16x128xf32>
    %1 = arith.truncf %0 : vector<16x128xf32> to vector<16x128xbf16>
    %c0_1 = arith.constant 0 : index
    %c0_2 = arith.constant 0 : index
    %2 = vector.load %arg2[%c0_1, %c0_2] : memref<128x128xbf16, #tpu.memory_space<vmem>>, vector<128x128xbf16>
    %cst = arith.constant dense<0.000000e+00> : vector<16x128xf32>
    %3 = tpu.matmul %1, %2, %cst {dimension_numbers = #tpu.dot_dimension_numbers<[1], [0], [0], [1], [0, 0, 1, 1], [], []>} : vector<16x128xbf16>, vector<128x128xbf16>, vector<16x128xf32> -> vector<16x128xf32>
    %c0_3 = arith.constant 0 : index
    %c0_4 = arith.constant 0 : index
    %4 = vector.load %arg3[%c0_3, %c0_4] : memref<1x128xf32, #tpu.memory_space<vmem>>, vector<1x128xf32>
    %5 = vector.broadcast %4 : vector<1x128xf32> to vector<16x128xf32>
    %6 = arith.addf %3, %5 : vector<16x128xf32>
    %cst_5 = arith.constant 5.000000e-01 : f32
    %7 = vector.broadcast %cst_5 : f32 to vector<16x128xf32>
    %8 = arith.mulf %7, %6 : vector<16x128xf32>
    %cst_6 = arith.constant 0.707106769 : f32
    %9 = vector.broadcast %cst_6 : f32 to vector<16x128xf32>
    %10 = arith.mulf %6, %9 : vector<16x128xf32>
    %11 = math.erf %10 : vector<16x128xf32>
    %cst_7 = arith.constant 1.000000e+00 : f32
    %12 = vector.broadcast %cst_7 : f32 to vector<16x128xf32>
    %13 = arith.addf %12, %11 : vector<16x128xf32>
    %14 = arith.mulf %8, %13 : vector<16x128xf32>
    %15 = arith.truncf %14 : vector<16x128xf32> to vector<16x128xbf16>
    %c0_8 = arith.constant 0 : index
    %c0_9 = arith.constant 0 : index
    %16 = vector.load %arg4[%c0_8, %c0_9] : memref<128x128xbf16, #tpu.memory_space<vmem>>, vector<128x128xbf16>
    %cst_10 = arith.constant dense<0.000000e+00> : vector<16x128xf32>
    %17 = tpu.matmul %15, %16, %cst_10 {dimension_numbers = #tpu.dot_dimension_numbers<[1], [0], [0], [1], [0, 0, 1, 1], [], []>} : vector<16x128xbf16>, vector<128x128xbf16>, vector<16x128xf32> -> vector<16x128xf32>
    %c0_11 = arith.constant 0 : index
    %c0_12 = arith.constant 0 : index
    %18 = vector.load %arg5[%c0_11, %c0_12] : memref<1x128xf32, #tpu.memory_space<vmem>>, vector<1x128xf32>
    %19 = vector.broadcast %18 : vector<1x128xf32> to vector<16x128xf32>
    %20 = arith.addf %17, %19 : vector<16x128xf32>
    %21 = arith.addf %20, %0 : vector<16x128xf32>
    %cst_13 = arith.constant dense<0.000000e+00> : vector<16xf32>
    %22 = vector.multi_reduction <add>, %21, %cst_13 [1] : vector<16x128xf32> to vector<16xf32>
    %23 = vector.shape_cast %22 : vector<16xf32> to vector<16x1xf32>
    %24 = arith.mulf %21, %21 : vector<16x128xf32>
    %cst_14 = arith.constant dense<0.000000e+00> : vector<16xf32>
    %25 = vector.multi_reduction <add>, %24, %cst_14 [1] : vector<16x128xf32> to vector<16xf32>
    %26 = vector.shape_cast %25 : vector<16xf32> to vector<16x1xf32>
    %cst_15 = arith.constant 3.125000e-02 : f32
    %27 = vector.broadcast %cst_15 : f32 to vector<16x1xf32>
    %28 = arith.mulf %23, %27 : vector<16x1xf32>
    %cst_16 = arith.constant 3.125000e-02 : f32
    %29 = vector.broadcast %cst_16 : f32 to vector<16x1xf32>
    %30 = arith.mulf %26, %29 : vector<16x1xf32>
    %31 = arith.mulf %28, %28 : vector<16x1xf32>
    %32 = arith.subf %30, %31 : vector<16x1xf32>
    %cst_17 = arith.constant 0.000000e+00 : f32
    %33 = vector.broadcast %cst_17 : f32 to vector<16x1xf32>
    %34 = arith.maximumf %32, %33 : vector<16x1xf32>
    %35 = vector.broadcast %28 : vector<16x1xf32> to vector<16x128xf32>
    %36 = arith.subf %21, %35 : vector<16x128xf32>
    %cst_18 = arith.constant 9.99999996E-13 : f32
    %37 = vector.broadcast %cst_18 : f32 to vector<16x1xf32>
    %38 = arith.addf %34, %37 : vector<16x1xf32>
    %39 = math.rsqrt %38 : vector<16x1xf32>
    %40 = vector.broadcast %39 : vector<16x1xf32> to vector<16x128xf32>
    %41 = arith.mulf %36, %40 : vector<16x128xf32>
    %c0_19 = arith.constant 0 : index
    %c0_20 = arith.constant 0 : index
    %42 = vector.load %arg6[%c0_19, %c0_20] : memref<1x128xf32, #tpu.memory_space<vmem>>, vector<1x128xf32>
    %43 = vector.broadcast %42 : vector<1x128xf32> to vector<16x128xf32>
    %44 = arith.mulf %41, %43 : vector<16x128xf32>
    %c0_21 = arith.constant 0 : index
    %c0_22 = arith.constant 0 : index
    %45 = vector.load %arg7[%c0_21, %c0_22] : memref<1x128xf32, #tpu.memory_space<vmem>>, vector<1x128xf32>
    %46 = vector.broadcast %45 : vector<1x128xf32> to vector<16x128xf32>
    %47 = arith.addf %44, %46 : vector<16x128xf32>
    %c0_23 = arith.constant 0 : index
    %c0_24 = arith.constant 0 : index
    %48 = vector.load %arg8[%c0_23, %c0_24] : memref<16x128xf32, #tpu.memory_space<vmem>>, vector<16x128xf32>
    tpu.vector_store %arg8[%c0_23, %c0_24], %47 {strides = array<i32>} : memref<16x128xf32, #tpu.memory_space<vmem>>, vector<16x128xf32>,
    return
  }
  func.func @transform_0(%arg0: i32) -> (i32, i32) {
    %c0_i32 = arith.constant 0 : i32
    %c0_i32_0 = arith.constant 0 : i32
    return %arg0, %c0_i32 : i32, i32
  }
  func.func @transform_1(%arg0: i32) -> (i32, i32) {
    %c0_i32 = arith.constant 0 : i32
    %c0_i32_0 = arith.constant 0 : i32
    %c0_i32_1 = arith.constant 0 : i32
    return %c0_i32, %c0_i32_0 : i32, i32
  }
  func.func @transform_2(%arg0: i32) -> (i32, i32) {
    %c0_i32 = arith.constant 0 : i32
    %c0_i32_0 = arith.constant 0 : i32
    %c0_i32_1 = arith.constant 0 : i32
    return %c0_i32, %c0_i32_0 : i32, i32
  }
  func.func @transform_3(%arg0: i32) -> (i32, i32) {
    %c0_i32 = arith.constant 0 : i32
    %c0_i32_0 = arith.constant 0 : i32
    %c0_i32_1 = arith.constant 0 : i32
    return %c0_i32, %c0_i32_0 : i32, i32
  }
  func.func @transform_4(%arg0: i32) -> (i32, i32) {
    %c0_i32 = arith.constant 0 : i32
    %c0_i32_0 = arith.constant 0 : i32
    %c0_i32_1 = arith.constant 0 : i32
    return %c0_i32, %c0_i32_0 : i32, i32
  }
  func.func @transform_5(%arg0: i32) -> (i32, i32) {
    %c0_i32 = arith.constant 0 : i32
    %c0_i32_0 = arith.constant 0 : i32
    %c0_i32_1 = arith.constant 0 : i32
    return %c0_i32, %c0_i32_0 : i32, i32
  }
  func.func @transform_6(%arg0: i32) -> (i32, i32) {
    %c0_i32 = arith.constant 0 : i32
    %c0_i32_0 = arith.constant 0 : i32
    %c0_i32_1 = arith.constant 0 : i32
    return %c0_i32, %c0_i32_0 : i32, i32
  }
  func.func @transform_7(%arg0: i32) -> (i32, i32) {
    %c0_i32 = arith.constant 0 : i32
    %c0_i32_0 = arith.constant 0 : i32
    return %arg0, %c0_i32 : i32, i32
  }
}

module attributes {stable_mosaic.version = 11 : i64} {
  func.func @_ffn_kernel(%arg0: i32, %arg1: memref<16x128xf32, #tpu.memory_space<vmem>>, %arg2: memref<128x128xbf16, #tpu.memory_space<vmem>>, %arg3: memref<1x128xf32, #tpu.memory_space<vmem>>, %arg4: memref<128x128xbf16, #tpu.memory_space<vmem>>, %arg5: memref<1x128xf32, #tpu.memory_space<vmem>>, %arg6: memref<1x128xf32, #tpu.memory_space<vmem>>, %arg7: memref<1x128xf32, #tpu.memory_space<vmem>>, %arg8: memref<16x128xf32, #tpu.memory_space<vmem>>) attributes {dimension_semantics = [#tpu.dimension_semantics<parallel>], iteration_bounds = array<i64: 1>, scalar_prefetch = 0 : i64, scratch_operands = 0 : i64, tpu.core_type = #tpu.core_type<tc>, window_params = [{transform_indices = @transform_0, window_bounds = array<i64: 16, 128>}, {pipeline_mode = #tpu.pipeline_mode<synchronous>, transform_indices = @transform_1, window_bounds = array<i64: 128, 128>}, {pipeline_mode = #tpu.pipeline_mode<synchronous>, transform_indices = @transform_2, window_bounds = array<i64: 1, 128>}, {pipeline_mode = #tpu.pipeline_mode<synchronous>, transform_indices = @transform_3, window_bounds = array<i64: 128, 128>}, {pipeline_mode = #tpu.pipeline_mode<synchronous>, transform_indices = @transform_4, window_bounds = array<i64: 1, 128>}, {pipeline_mode = #tpu.pipeline_mode<synchronous>, transform_indices = @transform_5, window_bounds = array<i64: 1, 128>}, {pipeline_mode = #tpu.pipeline_mode<synchronous>, transform_indices = @transform_6, window_bounds = array<i64: 1, 128>}, {transform_indices = @transform_7, window_bounds = array<i64: 16, 128>}]} {
    %c0 = arith.constant 0 : index
    %c0_0 = arith.constant 0 : index
    %0 = vector.load %arg1[%c0, %c0_0] : memref<16x128xf32, #tpu.memory_space<vmem>>, vector<16x128xf32>
    %1 = arith.truncf %0 : vector<16x128xf32> to vector<16x128xbf16>
    %c0_1 = arith.constant 0 : index
    %c0_2 = arith.constant 0 : index
    %2 = vector.load %arg2[%c0_1, %c0_2] : memref<128x128xbf16, #tpu.memory_space<vmem>>, vector<128x128xbf16>
    %cst = arith.constant dense<0.000000e+00> : vector<16x128xf32>
    %3 = tpu.matmul %1, %2, %cst {dimension_numbers = #tpu.dot_dimension_numbers<[1], [0], [0], [1], [0, 0, 1, 1], [], []>} : vector<16x128xbf16>, vector<128x128xbf16>, vector<16x128xf32> -> vector<16x128xf32>
    %c0_3 = arith.constant 0 : index
    %c0_4 = arith.constant 0 : index
    %4 = vector.load %arg3[%c0_3, %c0_4] : memref<1x128xf32, #tpu.memory_space<vmem>>, vector<1x128xf32>
    %5 = vector.broadcast %4 : vector<1x128xf32> to vector<16x128xf32>
    %6 = arith.addf %3, %5 : vector<16x128xf32>
    %cst_5 = arith.constant 5.000000e-01 : f32
    %7 = vector.broadcast %cst_5 : f32 to vector<16x128xf32>
    %8 = arith.mulf %7, %6 : vector<16x128xf32>
    %cst_6 = arith.constant 0.707106769 : f32
    %9 = vector.broadcast %cst_6 : f32 to vector<16x128xf32>
    %10 = arith.mulf %6, %9 : vector<16x128xf32>
    %11 = math.erf %10 : vector<16x128xf32>
    %cst_7 = arith.constant 1.000000e+00 : f32
    %12 = vector.broadcast %cst_7 : f32 to vector<16x128xf32>
    %13 = arith.addf %12, %11 : vector<16x128xf32>
    %14 = arith.mulf %8, %13 : vector<16x128xf32>
    %15 = arith.truncf %14 : vector<16x128xf32> to vector<16x128xbf16>
    %c0_8 = arith.constant 0 : index
    %c0_9 = arith.constant 0 : index
    %16 = vector.load %arg4[%c0_8, %c0_9] : memref<128x128xbf16, #tpu.memory_space<vmem>>, vector<128x128xbf16>
    %cst_10 = arith.constant dense<0.000000e+00> : vector<16x128xf32>
    %17 = tpu.matmul %15, %16, %cst_10 {dimension_numbers = #tpu.dot_dimension_numbers<[1], [0], [0], [1], [0, 0, 1, 1], [], []>} : vector<16x128xbf16>, vector<128x128xbf16>, vector<16x128xf32> -> vector<16x128xf32>
    %c0_11 = arith.constant 0 : index
    %c0_12 = arith.constant 0 : index
    %18 = vector.load %arg5[%c0_11, %c0_12] : memref<1x128xf32, #tpu.memory_space<vmem>>, vector<1x128xf32>
    %19 = vector.broadcast %18 : vector<1x128xf32> to vector<16x128xf32>
    %20 = arith.addf %17, %19 : vector<16x128xf32>
    %21 = arith.addf %20, %0 : vector<16x128xf32>
    %cst_13 = arith.constant dense<0.000000e+00> : vector<16xf32>
    %22 = vector.multi_reduction <add>, %21, %cst_13 [1] : vector<16x128xf32> to vector<16xf32>
    %23 = vector.shape_cast %22 : vector<16xf32> to vector<16x1xf32>
    %24 = arith.mulf %21, %21 : vector<16x128xf32>
    %cst_14 = arith.constant dense<0.000000e+00> : vector<16xf32>
    %25 = vector.multi_reduction <add>, %24, %cst_14 [1] : vector<16x128xf32> to vector<16xf32>
    %26 = vector.shape_cast %25 : vector<16xf32> to vector<16x1xf32>
    %cst_15 = arith.constant 3.125000e-02 : f32
    %27 = vector.broadcast %cst_15 : f32 to vector<16x1xf32>
    %28 = arith.mulf %23, %27 : vector<16x1xf32>
    %cst_16 = arith.constant 3.125000e-02 : f32
    %29 = vector.broadcast %cst_16 : f32 to vector<16x1xf32>
    %30 = arith.mulf %26, %29 : vector<16x1xf32>
    %31 = arith.mulf %28, %28 : vector<16x1xf32>
    %32 = arith.subf %30, %31 : vector<16x1xf32>
    %cst_17 = arith.constant 0.000000e+00 : f32
    %33 = vector.broadcast %cst_17 : f32 to vector<16x1xf32>
    %34 = arith.maximumf %32, %33 : vector<16x1xf32>
    %35 = vector.broadcast %28 : vector<16x1xf32> to vector<16x128xf32>
    %36 = arith.subf %21, %35 : vector<16x128xf32>
    %cst_18 = arith.constant 9.99999996E-13 : f32
    %37 = vector.broadcast %cst_18 : f32 to vector<16x1xf32>
    %38 = arith.addf %34, %37 : vector<16x1xf32>
    %39 = math.rsqrt %38 : vector<16x1xf32>
    %40 = vector.broadcast %39 : vector<16x1xf32> to vector<16x128xf32>
    %41 = arith.mulf %36, %40 : vector<16x128xf32>
    %c0_19 = arith.constant 0 : index
    %c0_20 = arith.constant 0 : index
    %42 = vector.load %arg6[%c0_19, %c0_20] : memref<1x128xf32, #tpu.memory_space<vmem>>, vector<1x128xf32>
    %43 = vector.broadcast %42 : vector<1x128xf32> to vector<16x128xf32>
    %44 = arith.mulf %41, %43 : vector<16x128xf32>
    %c0_21 = arith.constant 0 : index
    %c0_22 = arith.constant 0 : index
    %45 = vector.load %arg7[%c0_21, %c0_22] : memref<1x128xf32, #tpu.memory_space<vmem>>, vector<1x128xf32>
    %46 = vector.broadcast %45 : vector<1x128xf32> to vector<16x128xf32>
    %47 = arith.addf %44, %46 : vector<16x128xf32>
    %c0_23 = arith.constant 0 : index
    %c0_24 = arith.constant 0 : index
    %48 = vector.load %arg8[%c0_23, %c0_24] : memref<16x128xf32, #tpu.memory_space<vmem>>, vector<16x128xf32>
    tpu.vector_store %arg8[%c0_23, %c0_24], %47 {strides = array<i32>} : memref<16x128xf32, #tpu.memory_space<vmem>>, vector<16x128xf32>,
    return
  }
  func.func @transform_0(%arg0: i32) -> (i32, i32) {
    %c0_i32 = arith.constant 0 : i32
    %c0_i32_0 = arith.constant 0 : i32
    return %arg0, %c0_i32 : i32, i32
  }
  func.func @transform_1(%arg0: i32) -> (i32, i32) {
    %c0_i32 = arith.constant 0 : i32
    %c0_i32_0 = arith.constant 0 : i32
    %c0_i32_1 = arith.constant 0 : i32
    return %c0_i32, %c0_i32_0 : i32, i32
  }
  func.func @transform_2(%arg0: i32) -> (i32, i32) {
    %c0_i32 = arith.constant 0 : i32
    %c0_i32_0 = arith.constant 0 : i32
    %c0_i32_1 = arith.constant 0 : i32
    return %c0_i32, %c0_i32_0 : i32, i32
  }
  func.func @transform_3(%arg0: i32) -> (i32, i32) {
    %c0_i32 = arith.constant 0 : i32
    %c0_i32_0 = arith.constant 0 : i32
    %c0_i32_1 = arith.constant 0 : i32
    return %c0_i32, %c0_i32_0 : i32, i32
  }
  func.func @transform_4(%arg0: i32) -> (i32, i32) {
    %c0_i32 = arith.constant 0 : i32
    %c0_i32_0 = arith.constant 0 : i32
    %c0_i32_1 = arith.constant 0 : i32
    return %c0_i32, %c0_i32_0 : i32, i32
  }
  func.func @transform_5(%arg0: i32) -> (i32, i32) {
    %c0_i32 = arith.constant 0 : i32
    %c0_i32_0 = arith.constant 0 : i32
    %c0_i32_1 = arith.constant 0 : i32
    return %c0_i32, %c0_i32_0 : i32, i32
  }
  func.func @transform_6(%arg0: i32) -> (i32, i32) {
    %c0_i32 = arith.constant 0 : i32
    %c0_i32_0 = arith.constant 0 : i32
    %c0_i32_1 = arith.constant 0 : i32
    return %c0_i32, %c0_i32_0 : i32, i32
  }
  func.func @transform_7(%arg0: i32) -> (i32, i32) {
    %c0_i32 = arith.constant 0 : i32
    %c0_i32_0 = arith.constant 0 : i32
    return %arg0, %c0_i32 : i32, i32
  }
}

</mosaic_0001>

<llo_original>
// kernel: tpu_custom_call.1
$region0: #{tpu_custom_call.1}
  #allocation0 [shape = 'u32[]', space=smem, size = 0x4, offset = 0x4, fixed_abs, tag = 'smem constant byte address 0x4 - core index']
  #allocation1 [shape = 'u32[144,128]{1,0:T(1,128)}', space=vmem, size = 0x12000, scoped, tag = 'internal scratch']
  %s0 = inlined_call_operand.hbm [shape: f32[16,128], index: 0, kind: input, shape index: {}]
  %s1 = inlined_call_operand.hbm [shape: bf16[128,128], index: 1, kind: input, shape index: {}]
  %s2 = inlined_call_operand.vmem [shape: f32[1,128], index: 2, kind: input, shape index: {}]
  %s3 = inlined_call_operand.hbm [shape: bf16[128,128], index: 3, kind: input, shape index: {}]
  %s4 = inlined_call_operand.vmem [shape: f32[1,128], index: 4, kind: input, shape index: {}]
  %s5 = inlined_call_operand.vmem [shape: f32[1,128], index: 5, kind: input, shape index: {}]
  %s6 = inlined_call_operand.vmem [shape: f32[1,128], index: 6, kind: input, shape index: {}]
  %s7 = inlined_call_operand.hbm [shape: f32[16,128], index: 7, kind: output, shape index: {}]
  %s8 = sld [smem:[#allocation0]]
  $region50: #{tpu_custom_call.1} parent=0
    _
  %s10 = ssub.s32 1, %s8
  %s11 = scalar_select 0, %s10, %s8
  $region1: #{tpu_custom_call.1} parent=0
    #allocation2 [shape = 'u8[8192]{0}', space=vmem, size = 0x2000, scoped, tag = 'input window, operand 0, single buffered']
    #allocation3 [shape = 's32[1]{0}', space=sflag, size = 0x4, scoped, tag = 'scoped memory for tpu_custom_call.1']
    #allocation4 [shape = 's32[1]{0}', space=sflag, size = 0x4, scoped, tag = 'scoped memory for tpu_custom_call.1']
    #allocation5 [shape = 'u8[32768]{0}', space=vmem, size = 0x8000, scoped, tag = 'input window, operand 1, single buffered']
    #allocation6 [shape = 's32[1]{0}', space=sflag, size = 0x4, scoped, tag = 'scoped memory for tpu_custom_call.1']
    #allocation7 [shape = 'u8[32768]{0}', space=vmem, size = 0x8000, scoped, tag = 'input window, operand 3, single buffered']
    #allocation8 [shape = 'u8[8192]{0}', space=vmem, size = 0x2000, scoped, tag = 'output window, operand 0, single buffered']
    %12 = vsyncpa [#allocation3], 0
    %13 = vsyncpa [#allocation6], 0
    %14 = vsyncpa [#allocation4], 0
    // Predicated region
    $region2: #{tpu_custom_call.1} parent=1 // pred_check
      _
    $region3: #{tpu_custom_call.1} parent=1 // pred_check_branch
      %16 = sbr.rel (0) target = $region5
    $region4: #{tpu_custom_call.1} parent=1 // pred_region
      %s18 = ssub.s32 256, 256
      %19 = vsyncadd [#allocation3], %s18
      %s20 = sshll.u32 [#allocation2], 4
      %s21 = int_to_ptr.vmem [resolvable:$true] %s20
      %26 = dma.hbm_to_vmem [thread:$0]  %s0, 256, %s21, [#allocation3], 128, 128, 8
    $region5: #{tpu_custom_call.1} parent=1 // pred_fallthru
      _
    // Predicated region
    $region6: #{tpu_custom_call.1} parent=1 // pred_check
      _
    $region7: #{tpu_custom_call.1} parent=1 // pred_check_branch
      %28 = sbr.rel (0) target = $region9
    $region8: #{tpu_custom_call.1} parent=1 // pred_region
      %s30 = ssub.s32 1024, 1024
      %31 = vsyncadd [#allocation6], %s30
      %s32 = sshll.u32 [#allocation5], 4
      %s33 = int_to_ptr.vmem [resolvable:$true] %s32
      %38 = dma.hbm_to_vmem [thread:$0]  %s1, 1024, %s33, [#allocation6], 64, 64, 4
    $region9: #{tpu_custom_call.1} parent=1 // pred_fallthru
      _
    // Predicated region
    $region10: #{tpu_custom_call.1} parent=1 // pred_check
      _
    $region11: #{tpu_custom_call.1} parent=1 // pred_check_branch
      %40 = sbr.rel (0) target = $region13
    $region12: #{tpu_custom_call.1} parent=1 // pred_region
      _
    $region13: #{tpu_custom_call.1} parent=1 // pred_fallthru
      _
    // Predicated region
    $region14: #{tpu_custom_call.1} parent=1 // pred_check
      _
    $region15: #{tpu_custom_call.1} parent=1 // pred_check_branch
      %42 = sbr.rel (0) target = $region17
    $region16: #{tpu_custom_call.1} parent=1 // pred_region
      %s44 = ssub.s32 1024, 1024
      %45 = vsyncadd [#allocation6], %s44
      %s46 = sshll.u32 [#allocation7], 4
      %s47 = int_to_ptr.vmem [resolvable:$true] %s46
      %52 = dma.hbm_to_vmem [thread:$0]  %s3, 1024, %s47, [#allocation6], 64, 64, 4
    $region17: #{tpu_custom_call.1} parent=1 // pred_fallthru
      _
    // Predicated region
    $region18: #{tpu_custom_call.1} parent=1 // pred_check
      _
    $region19: #{tpu_custom_call.1} parent=1 // pred_check_branch
      %54 = sbr.rel (0) target = $region21
    $region20: #{tpu_custom_call.1} parent=1 // pred_region
      _
    $region21: #{tpu_custom_call.1} parent=1 // pred_fallthru
      _
    // Predicated region
    $region22: #{tpu_custom_call.1} parent=1 // pred_check
      _
    $region23: #{tpu_custom_call.1} parent=1 // pred_check_branch
      %56 = sbr.rel (0) target = $region25
    $region24: #{tpu_custom_call.1} parent=1 // pred_region
      _
    $region25: #{tpu_custom_call.1} parent=1 // pred_fallthru
      _
    // Predicated region
    $region26: #{tpu_custom_call.1} parent=1 // pred_check
      _
    $region27: #{tpu_custom_call.1} parent=1 // pred_check_branch
      %58 = sbr.rel (0) target = $region29
    $region28: #{tpu_custom_call.1} parent=1 // pred_region
      _
    $region29: #{tpu_custom_call.1} parent=1 // pred_fallthru
      _
    // Predicated region
    $region30: #{tpu_custom_call.1} parent=1 // pred_check
      _
    $region31: #{tpu_custom_call.1} parent=1 // pred_check_branch
      %60 = sbr.rel (0) target = $region33
    $region32: #{tpu_custom_call.1} parent=1 // pred_region
      %61 = dma.done [#allocation3], 256
    $region33: #{tpu_custom_call.1} parent=1 // pred_fallthru
      _
    // Predicated region
    $region34: #{tpu_custom_call.1} parent=1 // pred_check
      _
    $region35: #{tpu_custom_call.1} parent=1 // pred_check_branch
      %63 = sbr.rel (0) target = $region37
    $region36: #{tpu_custom_call.1} parent=1 // pred_region
      %64 = dma.done [#allocation6], 1024
    $region37: #{tpu_custom_call.1} parent=1 // pred_fallthru
      _
    // Predicated region
    $region38: #{tpu_custom_call.1} parent=1 // pred_check
      _
    $region39: #{tpu_custom_call.1} parent=1 // pred_check_branch
      %66 = sbr.rel (0) target = $region41
    $region40: #{tpu_custom_call.1} parent=1 // pred_region
      %67 = dma.done [#allocation6], 1024
    $region41: #{tpu_custom_call.1} parent=1 // pred_fallthru
      _
    %v69 = vld [vmem:[#allocation2] sm:$0xff]
    %v70 = vld [vmem:[#allocation2 + $0x8] sm:$0xff]
    %v71 = vpack.c.bf16 %v70, %v69
    %v72 = vld [vmem:[#allocation5] sm:$0xf]
    %v73 = vld [vmem:[#allocation5 + $0x4] sm:$0xf]
    %v74 = vld [vmem:[#allocation5 + $0x8] sm:$0xf]
    %v75 = vld [vmem:[#allocation5 + $0xc] sm:$0xf]
    %v76 = vld [vmem:[#allocation5 + $0x10] sm:$0xf]
    %v77 = vld [vmem:[#allocation5 + $0x14] sm:$0xf]
    %v78 = vld [vmem:[#allocation5 + $0x18] sm:$0xf]
    %v79 = vld [vmem:[#allocation5 + $0x1c] sm:$0xf]
    %v80 = vld [vmem:[#allocation5 + $0x20] sm:$0xf]
    %v81 = vld [vmem:[#allocation5 + $0x24] sm:$0xf]
    %v82 = vld [vmem:[#allocation5 + $0x28] sm:$0xf]
    %v83 = vld [vmem:[#allocation5 + $0x2c] sm:$0xf]
    %v84 = vld [vmem:[#allocation5 + $0x30] sm:$0xf]
    %v85 = vld [vmem:[#allocation5 + $0x34] sm:$0xf]
    %v86 = vld [vmem:[#allocation5 + $0x38] sm:$0xf]
    %v87 = vld [vmem:[#allocation5 + $0x3c] sm:$0xf]
    %v88 = vld [vmem:[%s2] sm:$0x1]
    %v90 = vlaneseq
    %v91 = vshrl.u32 %v90, 7
    %v92 = vsub.s32 0, %v91
    %v93 = vrot.slane %v88, %v92
    %v111 = vunpack.c.l.b16 %v72
    %v112 = vunpack.c.l.b16 %v73
    %v113 = vunpack.c.l.b16 %v74
    %v114 = vunpack.c.l.b16 %v75
    %v115 = vunpack.c.l.b16 %v76
    %v116 = vunpack.c.l.b16 %v77
    %v117 = vunpack.c.l.b16 %v78
    %v118 = vunpack.c.l.b16 %v79
    %v119 = vunpack.c.l.b16 %v80
    %v120 = vunpack.c.l.b16 %v81
    %v121 = vunpack.c.l.b16 %v82
    %v122 = vunpack.c.l.b16 %v83
    %v123 = vunpack.c.l.b16 %v84
    %v124 = vunpack.c.l.b16 %v85
    %v125 = vunpack.c.l.b16 %v86
    %v126 = vunpack.c.l.b16 %v87
    %v127 = vpack.c.b16 %v112, %v111
    %v128 = vpack.c.b16 %v114, %v113
    %v129 = vpack.c.b16 %v116, %v115
    %v130 = vpack.c.b16 %v118, %v117
    %v131 = vpack.c.b16 %v120, %v119
    %v132 = vpack.c.b16 %v122, %v121
    %v133 = vpack.c.b16 %v124, %v123
    %v134 = vpack.c.b16 %v126, %v125
    %143 = vmatprep.subr.bf16.mxu0 0
    %144 = vmatpush1.bf16.msra.mxu0 %v134
    %145 = vmatprep.subr.bf16.mxu0 0
    %146 = vmatpush1.bf16.msra.mxu0 %v133
    %147 = vmatprep.subr.bf16.mxu0 0
    %148 = vmatpush1.bf16.msra.mxu0 %v132
    %149 = vmatprep.subr.bf16.mxu0 0
    %150 = vmatpush1.bf16.msra.mxu0 %v131
    %151 = vmatprep.subr.bf16.mxu0 0
    %152 = vmatpush1.bf16.msra.mxu0 %v130
    %153 = vmatprep.subr.bf16.mxu0 0
    %154 = vmatpush1.bf16.msra.mxu0 %v129
    %155 = vmatprep.subr.bf16.mxu0 0
    %156 = vmatpush1.bf16.msra.mxu0 %v128
    %157 = vmatprep.subr.bf16.mxu0 0
    %158 = vmatpush1.bf16.msra.mxu0 %v127
    %159 = vmatprep.subr.bf16.mxu0 0
    %160 = vmatpush2.bf16.msra.mxu0 0
    %161 = vmatprep.subr.bf16.mxu0 0
    %162 = vmatpush2.bf16.msra.mxu0 0
    %163 = vmatprep.subr.bf16.mxu0 0
    %164 = vmatpush2.bf16.msra.mxu0 0
    %165 = vmatprep.subr.bf16.mxu0 0
    %166 = vmatpush2.bf16.msra.mxu0 0
    %167 = vmatprep.subr.bf16.mxu0 0
    %168 = vmatpush2.bf16.msra.mxu0 0
    %169 = vmatprep.subr.bf16.mxu0 0
    %170 = vmatpush2.bf16.msra.mxu0 0
    %171 = vmatprep.subr.bf16.mxu0 0
    %172 = vmatpush2.bf16.msra.mxu0 0
    %173 = vmatprep.subr.bf16.mxu0 0
    %174 = vmatpush2.bf16.msra.mxu0 0
    %175 = vmatprep.mubr.bf16.mxu0 0
    %176 = vmatmul.mubr.bf16.gmra.mxu0 %v71
    %v177 = vpop.f32.mrf.mxu0
    %v178 = vadd.f32 %v93, %v177
    %v179 = vpop.f32.mrf.mxu0
    %v180 = vpop.f32.mrf.mxu0
    %v181 = vadd.f32 %v93, %v180
    %v182 = vpop.f32.mrf.mxu0
    %183 = vdwg.mxu0
    %v184 = vmul.f32 %v178, 0.5
    %v185 = vmul.f32 %v181, 0.5
    %v186 = vmul.f32 %v178, 0.70710677
    %v187 = vmul.f32 %v181, 0.70710677
    %v188 = verf.f32.pop %v186
    %v189 = verf.f32.pop %v187
    %v190 = vadd.f32 %v188, 1.0
    %v191 = vadd.f32 %v189, 1.0
    %v192 = vmul.f32 %v184, %v190
    %v193 = vmul.f32 %v185, %v191
    %v194 = vpack.c.bf16 %v193, %v192
    %v195 = vld [vmem:[#allocation7] sm:$0xf]
    %v196 = vld [vmem:[#allocation7 + $0x4] sm:$0xf]
    %v197 = vld [vmem:[#allocation7 + $0x8] sm:$0xf]
    %v198 = vld [vmem:[#allocation7 + $0xc] sm:$0xf]
    %v199 = vld [vmem:[#allocation7 + $0x10] sm:$0xf]
    %v200 = vld [vmem:[#allocation7 + $0x14] sm:$0xf]
    %v201 = vld [vmem:[#allocation7 + $0x18] sm:$0xf]
    %v202 = vld [vmem:[#allocation7 + $0x1c] sm:$0xf]
    %v203 = vld [vmem:[#allocation7 + $0x20] sm:$0xf]
    %v204 = vld [vmem:[#allocation7 + $0x24] sm:$0xf]
    %v205 = vld [vmem:[#allocation7 + $0x28] sm:$0xf]
    %v206 = vld [vmem:[#allocation7 + $0x2c] sm:$0xf]
    %v207 = vld [vmem:[#allocation7 + $0x30] sm:$0xf]
    %v208 = vld [vmem:[#allocation7 + $0x34] sm:$0xf]
    %v209 = vld [vmem:[#allocation7 + $0x38] sm:$0xf]
    %v210 = vld [vmem:[#allocation7 + $0x3c] sm:$0xf]
    %v211 = vld [vmem:[%s4] sm:$0x1]
    %v213 = vlaneseq
    %v214 = vshrl.u32 %v213, 7
    %v215 = vsub.s32 0, %v214
    %v216 = vrot.slane %v211, %v215
    %v234 = vunpack.c.l.b16 %v195
    %v235 = vunpack.c.l.b16 %v196
    %v236 = vunpack.c.l.b16 %v197
    %v237 = vunpack.c.l.b16 %v198
    %v238 = vunpack.c.l.b16 %v199
    %v239 = vunpack.c.l.b16 %v200
    %v240 = vunpack.c.l.b16 %v201
    %v241 = vunpack.c.l.b16 %v202
    %v242 = vunpack.c.l.b16 %v203
    %v243 = vunpack.c.l.b16 %v204
    %v244 = vunpack.c.l.b16 %v205
    %v245 = vunpack.c.l.b16 %v206
    %v246 = vunpack.c.l.b16 %v207
    %v247 = vunpack.c.l.b16 %v208
    %v248 = vunpack.c.l.b16 %v209
    %v249 = vunpack.c.l.b16 %v210
    %v250 = vpack.c.b16 %v235, %v234
    %v251 = vpack.c.b16 %v237, %v236
    %v252 = vpack.c.b16 %v239, %v238
    %v253 = vpack.c.b16 %v241, %v240
    %v254 = vpack.c.b16 %v243, %v242
    %v255 = vpack.c.b16 %v245, %v244
    %v256 = vpack.c.b16 %v247, %v246
    %v257 = vpack.c.b16 %v249, %v248
    %266 = vmatprep.subr.bf16.mxu0 0
    %267 = vmatpush1.bf16.msra.mxu0 %v257
    %268 = vmatprep.subr.bf16.mxu0 0
    %269 = vmatpush1.bf16.msra.mxu0 %v256
    %270 = vmatprep.subr.bf16.mxu0 0
    %271 = vmatpush1.bf16.msra.mxu0 %v255
    %272 = vmatprep.subr.bf16.mxu0 0
    %273 = vmatpush1.bf16.msra.mxu0 %v254
    %274 = vmatprep.subr.bf16.mxu0 0
    %275 = vmatpush1.bf16.msra.mxu0 %v253
    %276 = vmatprep.subr.bf16.mxu0 0
    %277 = vmatpush1.bf16.msra.mxu0 %v252
    %278 = vmatprep.subr.bf16.mxu0 0
    %279 = vmatpush1.bf16.msra.mxu0 %v251
    %280 = vmatprep.subr.bf16.mxu0 0
    %281 = vmatpush1.bf16.msra.mxu0 %v250
    %282 = vmatprep.subr.bf16.mxu0 0
    %283 = vmatpush2.bf16.msra.mxu0 0
    %284 = vmatprep.subr.bf16.mxu0 0
    %285 = vmatpush2.bf16.msra.mxu0 0
    %286 = vmatprep.subr.bf16.mxu0 0
    %287 = vmatpush2.bf16.msra.mxu0 0
    %288 = vmatprep.subr.bf16.mxu0 0
    %289 = vmatpush2.bf16.msra.mxu0 0
    %290 = vmatprep.subr.bf16.mxu0 0
    %291 = vmatpush2.bf16.msra.mxu0 0
    %292 = vmatprep.subr.bf16.mxu0 0
    %293 = vmatpush2.bf16.msra.mxu0 0
    %294 = vmatprep.subr.bf16.mxu0 0
    %295 = vmatpush2.bf16.msra.mxu0 0
    %296 = vmatprep.subr.bf16.mxu0 0
    %297 = vmatpush2.bf16.msra.mxu0 0
    %298 = vmatprep.mubr.bf16.mxu0 0
    %299 = vmatmul.mubr.bf16.gmra.mxu0 %v194
    %v300 = vpop.f32.mrf.mxu0
    %v301 = vadd.f32 %v216, %v300
    %v302 = vpop.f32.mrf.mxu0
    %v303 = vpop.f32.mrf.mxu0
    %v304 = vadd.f32 %v216, %v303
    %v305 = vpop.f32.mrf.mxu0
    %306 = vdwg.mxu0
    %v307 = vadd.f32 %v301, %v69
    %v308 = vadd.f32 %v304, %v70
    %309 = vadd.xlane.f32.xlu0 %v307
    %v310 = vpop.xlane.xlu0 %309
    %311 = vadd.xlane.f32.xlu0 %v308
    %v312 = vpop.xlane.xlu0 %311
    %v313 = vmul.f32 %v307, %v307
    %v314 = vmul.f32 %v308, %v308
    %315 = vadd.xlane.f32.xlu0 %v313
    %v316 = vpop.xlane.xlu0 %315
    %317 = vadd.xlane.f32.xlu0 %v314
    %v318 = vpop.xlane.xlu0 %317
    %v319 = vmul.f32 %v310, 0.03125
    %v320 = vmul.f32 %v312, 0.03125
    %v321 = vmul.f32 %v316, 0.03125
    %v322 = vmul.f32 %v318, 0.03125
    %v323 = vmul.f32 %v319, %v319
    %v324 = vmul.f32 %v320, %v320
    %v325 = vsub.f32 %v321, %v323
    %v326 = vsub.f32 %v322, %v324
    %v327 = vmax.f32 %v325, 0.0
    %v328 = vmax.f32 %v326, 0.0
    %v329 = vsub.f32 %v307, %v319
    %v330 = vsub.f32 %v308, %v320
    %v331 = vadd.f32 %v327, 1e-12
    %v332 = vadd.f32 %v328, 1e-12
    %v333 = vrsqrt.pop %v331
    %v334 = vrsqrt.pop %v332
    %v335 = vmul.f32 %v329, %v333
    %v336 = vmul.f32 %v330, %v334
    %v337 = vld [vmem:[%s5] sm:$0x1]
    %v339 = vlaneseq
    %v340 = vshrl.u32 %v339, 7
    %v341 = vsub.s32 0, %v340
    %v342 = vrot.slane %v337, %v341
    %v344 = vmul.f32 %v335, %v342
    %v345 = vmul.f32 %v336, %v342
    %v346 = vld [vmem:[%s6] sm:$0x1]
    %v348 = vlaneseq
    %v349 = vshrl.u32 %v348, 7
    %v350 = vsub.s32 0, %v349
    %v351 = vrot.slane %v346, %v350
    %v353 = vadd.f32 %v344, %v351
    %v354 = vadd.f32 %v345, %v351
    %355 = vst [vmem:[#allocation8] sm:$0xff] %v353
    %356 = vst [vmem:[#allocation8 + $0x8] sm:$0xff] %v354
    // Predicated region
    $region42: #{tpu_custom_call.1} parent=1 // pred_check
      _
    $region43: #{tpu_custom_call.1} parent=1 // pred_check_branch
      %358 = sbr.rel (0) target = $region45
    $region44: #{tpu_custom_call.1} parent=1 // pred_region
      %s360 = ssub.s32 256, 256
      %361 = vsyncadd [#allocation4], %s360
      %s362 = sshll.u32 [#allocation8], 4
      %s363 = int_to_ptr.vmem [resolvable:$true] %s362
      %368 = dma.vmem_to_hbm [thread:$0]  %s363, 256, %s7, [#allocation4], 128, 128, 8
    $region45: #{tpu_custom_call.1} parent=1 // pred_fallthru
      _
    // Predicated region
    $region46: #{tpu_custom_call.1} parent=1 // pred_check
      _
    $region47: #{tpu_custom_call.1} parent=1 // pred_check_branch
      %370 = sbr.rel (0) target = $region49
    $region48: #{tpu_custom_call.1} parent=1 // pred_region
      %371 = dma.done [#allocation4], 256
    $region49: #{tpu_custom_call.1} parent=1 // pred_fallthru
      _
    %372 = vsyncpa [#allocation3], 1
    %373 = vsyncpa [#allocation6], 1
    %374 = vsyncpa [#allocation4], 1

// kernel: tpu_custom_call.1
$region0: #{tpu_custom_call.1}
  #allocation0 [shape = 'u32[]', space=smem, size = 0x4, offset = 0x4, fixed_abs, tag = 'smem constant byte address 0x4 - core index']
  #allocation1 [shape = 'u32[144,128]{1,0:T(1,128)}', space=vmem, size = 0x12000, scoped, tag = 'internal scratch']
  %s0 = inlined_call_operand.hbm [shape: f32[16,128], index: 0, kind: input, shape index: {}]
  %s1 = inlined_call_operand.hbm [shape: bf16[128,128], index: 1, kind: input, shape index: {}]
  %s2 = inlined_call_operand.vmem [shape: f32[1,128], index: 2, kind: input, shape index: {}]
  %s3 = inlined_call_operand.hbm [shape: bf16[128,128], index: 3, kind: input, shape index: {}]
  %s4 = inlined_call_operand.vmem [shape: f32[1,128], index: 4, kind: input, shape index: {}]
  %s5 = inlined_call_operand.vmem [shape: f32[1,128], index: 5, kind: input, shape index: {}]
  %s6 = inlined_call_operand.vmem [shape: f32[1,128], index: 6, kind: input, shape index: {}]
  %s7 = inlined_call_operand.hbm [shape: f32[16,128], index: 7, kind: output, shape index: {}]
  %s8 = sld [smem:[#allocation0]]
  $region50: #{tpu_custom_call.1} parent=0
    _
  %s10 = ssub.s32 1, %s8
  %s11 = scalar_select 0, %s10, %s8
  $region1: #{tpu_custom_call.1} parent=0
    #allocation2 [shape = 'u8[8192]{0}', space=vmem, size = 0x2000, scoped, tag = 'input window, operand 0, single buffered']
    #allocation3 [shape = 's32[1]{0}', space=sflag, size = 0x4, scoped, tag = 'scoped memory for tpu_custom_call.1']
    #allocation4 [shape = 's32[1]{0}', space=sflag, size = 0x4, scoped, tag = 'scoped memory for tpu_custom_call.1']
    #allocation5 [shape = 'u8[32768]{0}', space=vmem, size = 0x8000, scoped, tag = 'input window, operand 1, single buffered']
    #allocation6 [shape = 's32[1]{0}', space=sflag, size = 0x4, scoped, tag = 'scoped memory for tpu_custom_call.1']
    #allocation7 [shape = 'u8[32768]{0}', space=vmem, size = 0x8000, scoped, tag = 'input window, operand 3, single buffered']
    #allocation8 [shape = 'u8[8192]{0}', space=vmem, size = 0x2000, scoped, tag = 'output window, operand 0, single buffered']
    %12 = vsyncpa [#allocation3], 0
    %13 = vsyncpa [#allocation6], 0
    %14 = vsyncpa [#allocation4], 0
    // Predicated region
    $region2: #{tpu_custom_call.1} parent=1 // pred_check
      _
    $region3: #{tpu_custom_call.1} parent=1 // pred_check_branch
      %16 = sbr.rel (0) target = $region5
    $region4: #{tpu_custom_call.1} parent=1 // pred_region
      %s18 = ssub.s32 256, 256
      %19 = vsyncadd [#allocation3], %s18
      %s20 = sshll.u32 [#allocation2], 4
      %s21 = int_to_ptr.vmem [resolvable:$true] %s20
      %26 = dma.hbm_to_vmem [thread:$0]  %s0, 256, %s21, [#allocation3], 128, 128, 8
    $region5: #{tpu_custom_call.1} parent=1 // pred_fallthru
      _
    // Predicated region
    $region6: #{tpu_custom_call.1} parent=1 // pred_check
      _
    $region7: #{tpu_custom_call.1} parent=1 // pred_check_branch
      %28 = sbr.rel (0) target = $region9
    $region8: #{tpu_custom_call.1} parent=1 // pred_region
      %s30 = ssub.s32 1024, 1024
      %31 = vsyncadd [#allocation6], %s30
      %s32 = sshll.u32 [#allocation5], 4
      %s33 = int_to_ptr.vmem [resolvable:$true] %s32
      %38 = dma.hbm_to_vmem [thread:$0]  %s1, 1024, %s33, [#allocation6], 64, 64, 4
    $region9: #{tpu_custom_call.1} parent=1 // pred_fallthru
      _
    // Predicated region
    $region10: #{tpu_custom_call.1} parent=1 // pred_check
      _
    $region11: #{tpu_custom_call.1} parent=1 // pred_check_branch
      %40 = sbr.rel (0) target = $region13
    $region12: #{tpu_custom_call.1} parent=1 // pred_region
      _
    $region13: #{tpu_custom_call.1} parent=1 // pred_fallthru
      _
    // Predicated region
    $region14: #{tpu_custom_call.1} parent=1 // pred_check
      _
    $region15: #{tpu_custom_call.1} parent=1 // pred_check_branch
      %42 = sbr.rel (0) target = $region17
    $region16: #{tpu_custom_call.1} parent=1 // pred_region
      %s44 = ssub.s32 1024, 1024
      %45 = vsyncadd [#allocation6], %s44
      %s46 = sshll.u32 [#allocation7], 4
      %s47 = int_to_ptr.vmem [resolvable:$true] %s46
      %52 = dma.hbm_to_vmem [thread:$0]  %s3, 1024, %s47, [#allocation6], 64, 64, 4
    $region17: #{tpu_custom_call.1} parent=1 // pred_fallthru
      _
    // Predicated region
    $region18: #{tpu_custom_call.1} parent=1 // pred_check
      _
    $region19: #{tpu_custom_call.1} parent=1 // pred_check_branch
      %54 = sbr.rel (0) target = $region21
    $region20: #{tpu_custom_call.1} parent=1 // pred_region
      _
    $region21: #{tpu_custom_call.1} parent=1 // pred_fallthru
      _
    // Predicated region
    $region22: #{tpu_custom_call.1} parent=1 // pred_check
      _
    $region23: #{tpu_custom_call.1} parent=1 // pred_check_branch
      %56 = sbr.rel (0) target = $region25
    $region24: #{tpu_custom_call.1} parent=1 // pred_region
      _
    $region25: #{tpu_custom_call.1} parent=1 // pred_fallthru
      _
    // Predicated region
    $region26: #{tpu_custom_call.1} parent=1 // pred_check
      _
    $region27: #{tpu_custom_call.1} parent=1 // pred_check_branch
      %58 = sbr.rel (0) target = $region29
    $region28: #{tpu_custom_call.1} parent=1 // pred_region
      _
    $region29: #{tpu_custom_call.1} parent=1 // pred_fallthru
      _
    // Predicated region
    $region30: #{tpu_custom_call.1} parent=1 // pred_check
      _
    $region31: #{tpu_custom_call.1} parent=1 // pred_check_branch
      %60 = sbr.rel (0) target = $region33
    $region32: #{tpu_custom_call.1} parent=1 // pred_region
      %61 = dma.done [#allocation3], 256
    $region33: #{tpu_custom_call.1} parent=1 // pred_fallthru
      _
    // Predicated region
    $region34: #{tpu_custom_call.1} parent=1 // pred_check
      _
    $region35: #{tpu_custom_call.1} parent=1 // pred_check_branch
      %63 = sbr.rel (0) target = $region37
    $region36: #{tpu_custom_call.1} parent=1 // pred_region
      %64 = dma.done [#allocation6], 1024
    $region37: #{tpu_custom_call.1} parent=1 // pred_fallthru
      _
    // Predicated region
    $region38: #{tpu_custom_call.1} parent=1 // pred_check
      _
    $region39: #{tpu_custom_call.1} parent=1 // pred_check_branch
      %66 = sbr.rel (0) target = $region41
    $region40: #{tpu_custom_call.1} parent=1 // pred_region
      %67 = dma.done [#allocation6], 1024
    $region41: #{tpu_custom_call.1} parent=1 // pred_fallthru
      _
    %v69 = vld [vmem:[#allocation2] sm:$0xff]
    %v70 = vld [vmem:[#allocation2 + $0x8] sm:$0xff]
    %v71 = vpack.c.bf16 %v70, %v69
    %v72 = vld [vmem:[#allocation5] sm:$0xf]
    %v73 = vld [vmem:[#allocation5 + $0x4] sm:$0xf]
    %v74 = vld [vmem:[#allocation5 + $0x8] sm:$0xf]
    %v75 = vld [vmem:[#allocation5 + $0xc] sm:$0xf]
    %v76 = vld [vmem:[#allocation5 + $0x10] sm:$0xf]
    %v77 = vld [vmem:[#allocation5 + $0x14] sm:$0xf]
    %v78 = vld [vmem:[#allocation5 + $0x18] sm:$0xf]
    %v79 = vld [vmem:[#allocation5 + $0x1c] sm:$0xf]
    %v80 = vld [vmem:[#allocation5 + $0x20] sm:$0xf]
    %v81 = vld [vmem:[#allocation5 + $0x24] sm:$0xf]
    %v82 = vld [vmem:[#allocation5 + $0x28] sm:$0xf]
    %v83 = vld [vmem:[#allocation5 + $0x2c] sm:$0xf]
    %v84 = vld [vmem:[#allocation5 + $0x30] sm:$0xf]
    %v85 = vld [vmem:[#allocation5 + $0x34] sm:$0xf]
    %v86 = vld [vmem:[#allocation5 + $0x38] sm:$0xf]
    %v87 = vld [vmem:[#allocation5 + $0x3c] sm:$0xf]
    %v88 = vld [vmem:[%s2] sm:$0x1]
    %v90 = vlaneseq
    %v91 = vshrl.u32 %v90, 7
    %v92 = vsub.s32 0, %v91
    %v93 = vrot.slane %v88, %v92
    %v111 = vunpack.c.l.b16 %v72
    %v112 = vunpack.c.l.b16 %v73
    %v113 = vunpack.c.l.b16 %v74
    %v114 = vunpack.c.l.b16 %v75
    %v115 = vunpack.c.l.b16 %v76
    %v116 = vunpack.c.l.b16 %v77
    %v117 = vunpack.c.l.b16 %v78
    %v118 = vunpack.c.l.b16 %v79
    %v119 = vunpack.c.l.b16 %v80
    %v120 = vunpack.c.l.b16 %v81
    %v121 = vunpack.c.l.b16 %v82
    %v122 = vunpack.c.l.b16 %v83
    %v123 = vunpack.c.l.b16 %v84
    %v124 = vunpack.c.l.b16 %v85
    %v125 = vunpack.c.l.b16 %v86
    %v126 = vunpack.c.l.b16 %v87
    %v127 = vpack.c.b16 %v112, %v111
    %v128 = vpack.c.b16 %v114, %v113
    %v129 = vpack.c.b16 %v116, %v115
    %v130 = vpack.c.b16 %v118, %v117
    %v131 = vpack.c.b16 %v120, %v119
    %v132 = vpack.c.b16 %v122, %v121
    %v133 = vpack.c.b16 %v124, %v123
    %v134 = vpack.c.b16 %v126, %v125
    %143 = vmatprep.subr.bf16.mxu0 0
    %144 = vmatpush1.bf16.msra.mxu0 %v134
    %145 = vmatprep.subr.bf16.mxu0 0
    %146 = vmatpush1.bf16.msra.mxu0 %v133
    %147 = vmatprep.subr.bf16.mxu0 0
    %148 = vmatpush1.bf16.msra.mxu0 %v132
    %149 = vmatprep.subr.bf16.mxu0 0
    %150 = vmatpush1.bf16.msra.mxu0 %v131
    %151 = vmatprep.subr.bf16.mxu0 0
    %152 = vmatpush1.bf16.msra.mxu0 %v130
    %153 = vmatprep.subr.bf16.mxu0 0
    %154 = vmatpush1.bf16.msra.mxu0 %v129
    %155 = vmatprep.subr.bf16.mxu0 0
    %156 = vmatpush1.bf16.msra.mxu0 %v128
    %157 = vmatprep.subr.bf16.mxu0 0
    %158 = vmatpush1.bf16.msra.mxu0 %v127
    %159 = vmatprep.subr.bf16.mxu0 0
    %160 = vmatpush2.bf16.msra.mxu0 0
    %161 = vmatprep.subr.bf16.mxu0 0
    %162 = vmatpush2.bf16.msra.mxu0 0
    %163 = vmatprep.subr.bf16.mxu0 0
    %164 = vmatpush2.bf16.msra.mxu0 0
    %165 = vmatprep.subr.bf16.mxu0 0
    %166 = vmatpush2.bf16.msra.mxu0 0
    %167 = vmatprep.subr.bf16.mxu0 0
    %168 = vmatpush2.bf16.msra.mxu0 0
    %169 = vmatprep.subr.bf16.mxu0 0
    %170 = vmatpush2.bf16.msra.mxu0 0
    %171 = vmatprep.subr.bf16.mxu0 0
    %172 = vmatpush2.bf16.msra.mxu0 0
    %173 = vmatprep.subr.bf16.mxu0 0
    %174 = vmatpush2.bf16.msra.mxu0 0
    %175 = vmatprep.mubr.bf16.mxu0 0
    %176 = vmatmul.mubr.bf16.gmra.mxu0 %v71
    %v177 = vpop.f32.mrf.mxu0
    %v178 = vadd.f32 %v93, %v177
    %v179 = vpop.f32.mrf.mxu0
    %v180 = vpop.f32.mrf.mxu0
    %v181 = vadd.f32 %v93, %v180
    %v182 = vpop.f32.mrf.mxu0
    %183 = vdwg.mxu0
    %v184 = vmul.f32 %v178, 0.5
    %v185 = vmul.f32 %v181, 0.5
    %v186 = vmul.f32 %v178, 0.70710677
    %v187 = vmul.f32 %v181, 0.70710677
    %v188 = verf.f32.pop %v186
    %v189 = verf.f32.pop %v187
    %v190 = vadd.f32 %v188, 1.0
    %v191 = vadd.f32 %v189, 1.0
    %v192 = vmul.f32 %v184, %v190
    %v193 = vmul.f32 %v185, %v191
    %v194 = vpack.c.bf16 %v193, %v192
    %v195 = vld [vmem:[#allocation7] sm:$0xf]
    %v196 = vld [vmem:[#allocation7 + $0x4] sm:$0xf]
    %v197 = vld [vmem:[#allocation7 + $0x8] sm:$0xf]
    %v198 = vld [vmem:[#allocation7 + $0xc] sm:$0xf]
    %v199 = vld [vmem:[#allocation7 + $0x10] sm:$0xf]
    %v200 = vld [vmem:[#allocation7 + $0x14] sm:$0xf]
    %v201 = vld [vmem:[#allocation7 + $0x18] sm:$0xf]
    %v202 = vld [vmem:[#allocation7 + $0x1c] sm:$0xf]
    %v203 = vld [vmem:[#allocation7 + $0x20] sm:$0xf]
    %v204 = vld [vmem:[#allocation7 + $0x24] sm:$0xf]
    %v205 = vld [vmem:[#allocation7 + $0x28] sm:$0xf]
    %v206 = vld [vmem:[#allocation7 + $0x2c] sm:$0xf]
    %v207 = vld [vmem:[#allocation7 + $0x30] sm:$0xf]
    %v208 = vld [vmem:[#allocation7 + $0x34] sm:$0xf]
    %v209 = vld [vmem:[#allocation7 + $0x38] sm:$0xf]
    %v210 = vld [vmem:[#allocation7 + $0x3c] sm:$0xf]
    %v211 = vld [vmem:[%s4] sm:$0x1]
    %v213 = vlaneseq
    %v214 = vshrl.u32 %v213, 7
    %v215 = vsub.s32 0, %v214
    %v216 = vrot.slane %v211, %v215
    %v234 = vunpack.c.l.b16 %v195
    %v235 = vunpack.c.l.b16 %v196
    %v236 = vunpack.c.l.b16 %v197
    %v237 = vunpack.c.l.b16 %v198
    %v238 = vunpack.c.l.b16 %v199
    %v239 = vunpack.c.l.b16 %v200
    %v240 = vunpack.c.l.b16 %v201
    %v241 = vunpack.c.l.b16 %v202
    %v242 = vunpack.c.l.b16 %v203
    %v243 = vunpack.c.l.b16 %v204
    %v244 = vunpack.c.l.b16 %v205
    %v245 = vunpack.c.l.b16 %v206
    %v246 = vunpack.c.l.b16 %v207
    %v247 = vunpack.c.l.b16 %v208
    %v248 = vunpack.c.l.b16 %v209
    %v249 = vunpack.c.l.b16 %v210
    %v250 = vpack.c.b16 %v235, %v234
    %v251 = vpack.c.b16 %v237, %v236
    %v252 = vpack.c.b16 %v239, %v238
    %v253 = vpack.c.b16 %v241, %v240
    %v254 = vpack.c.b16 %v243, %v242
    %v255 = vpack.c.b16 %v245, %v244
    %v256 = vpack.c.b16 %v247, %v246
    %v257 = vpack.c.b16 %v249, %v248
    %266 = vmatprep.subr.bf16.mxu0 0
    %267 = vmatpush1.bf16.msra.mxu0 %v257
    %268 = vmatprep.subr.bf16.mxu0 0
    %269 = vmatpush1.bf16.msra.mxu0 %v256
    %270 = vmatprep.subr.bf16.mxu0 0
    %271 = vmatpush1.bf16.msra.mxu0 %v255
    %272 = vmatprep.subr.bf16.mxu0 0
    %273 = vmatpush1.bf16.msra.mxu0 %v254
    %274 = vmatprep.subr.bf16.mxu0 0
    %275 = vmatpush1.bf16.msra.mxu0 %v253
    %276 = vmatprep.subr.bf16.mxu0 0
    %277 = vmatpush1.bf16.msra.mxu0 %v252
    %278 = vmatprep.subr.bf16.mxu0 0
    %279 = vmatpush1.bf16.msra.mxu0 %v251
    %280 = vmatprep.subr.bf16.mxu0 0
    %281 = vmatpush1.bf16.msra.mxu0 %v250
    %282 = vmatprep.subr.bf16.mxu0 0
    %283 = vmatpush2.bf16.msra.mxu0 0
    %284 = vmatprep.subr.bf16.mxu0 0
    %285 = vmatpush2.bf16.msra.mxu0 0
    %286 = vmatprep.subr.bf16.mxu0 0
    %287 = vmatpush2.bf16.msra.mxu0 0
    %288 = vmatprep.subr.bf16.mxu0 0
    %289 = vmatpush2.bf16.msra.mxu0 0
    %290 = vmatprep.subr.bf16.mxu0 0
    %291 = vmatpush2.bf16.msra.mxu0 0
    %292 = vmatprep.subr.bf16.mxu0 0
    %293 = vmatpush2.bf16.msra.mxu0 0
    %294 = vmatprep.subr.bf16.mxu0 0
    %295 = vmatpush2.bf16.msra.mxu0 0
    %296 = vmatprep.subr.bf16.mxu0 0
    %297 = vmatpush2.bf16.msra.mxu0 0
    %298 = vmatprep.mubr.bf16.mxu0 0
    %299 = vmatmul.mubr.bf16.gmra.mxu0 %v194
    %v300 = vpop.f32.mrf.mxu0
    %v301 = vadd.f32 %v216, %v300
    %v302 = vpop.f32.mrf.mxu0
    %v303 = vpop.f32.mrf.mxu0
    %v304 = vadd.f32 %v216, %v303
    %v305 = vpop.f32.mrf.mxu0
    %306 = vdwg.mxu0
    %v307 = vadd.f32 %v301, %v69
    %v308 = vadd.f32 %v304, %v70
    %309 = vadd.xlane.f32.xlu0 %v307
    %v310 = vpop.xlane.xlu0 %309
    %311 = vadd.xlane.f32.xlu0 %v308
    %v312 = vpop.xlane.xlu0 %311
    %v313 = vmul.f32 %v307, %v307
    %v314 = vmul.f32 %v308, %v308
    %315 = vadd.xlane.f32.xlu0 %v313
    %v316 = vpop.xlane.xlu0 %315
    %317 = vadd.xlane.f32.xlu0 %v314
    %v318 = vpop.xlane.xlu0 %317
    %v319 = vmul.f32 %v310, 0.03125
    %v320 = vmul.f32 %v312, 0.03125
    %v321 = vmul.f32 %v316, 0.03125
    %v322 = vmul.f32 %v318, 0.03125
    %v323 = vmul.f32 %v319, %v319
    %v324 = vmul.f32 %v320, %v320
    %v325 = vsub.f32 %v321, %v323
    %v326 = vsub.f32 %v322, %v324
    %v327 = vmax.f32 %v325, 0.0
    %v328 = vmax.f32 %v326, 0.0
    %v329 = vsub.f32 %v307, %v319
    %v330 = vsub.f32 %v308, %v320
    %v331 = vadd.f32 %v327, 1e-12
    %v332 = vadd.f32 %v328, 1e-12
    %v333 = vrsqrt.pop %v331
    %v334 = vrsqrt.pop %v332
    %v335 = vmul.f32 %v329, %v333
    %v336 = vmul.f32 %v330, %v334
    %v337 = vld [vmem:[%s5] sm:$0x1]
    %v339 = vlaneseq
    %v340 = vshrl.u32 %v339, 7
    %v341 = vsub.s32 0, %v340
    %v342 = vrot.slane %v337, %v341
    %v344 = vmul.f32 %v335, %v342
    %v345 = vmul.f32 %v336, %v342
    %v346 = vld [vmem:[%s6] sm:$0x1]
    %v348 = vlaneseq
    %v349 = vshrl.u32 %v348, 7
    %v350 = vsub.s32 0, %v349
    %v351 = vrot.slane %v346, %v350
    %v353 = vadd.f32 %v344, %v351
    %v354 = vadd.f32 %v345, %v351
    %355 = vst [vmem:[#allocation8] sm:$0xff] %v353
    %356 = vst [vmem:[#allocation8 + $0x8] sm:$0xff] %v354
    // Predicated region
    $region42: #{tpu_custom_call.1} parent=1 // pred_check
      _
    $region43: #{tpu_custom_call.1} parent=1 // pred_check_branch
      %358 = sbr.rel (0) target = $region45
    $region44: #{tpu_custom_call.1} parent=1 // pred_region
      %s360 = ssub.s32 256, 256
      %361 = vsyncadd [#allocation4], %s360
      %s362 = sshll.u32 [#allocation8], 4
      %s363 = int_to_ptr.vmem [resolvable:$true] %s362
      %368 = dma.vmem_to_hbm [thread:$0]  %s363, 256, %s7, [#allocation4], 128, 128, 8
    $region45: #{tpu_custom_call.1} parent=1 // pred_fallthru
      _
    // Predicated region
    $region46: #{tpu_custom_call.1} parent=1 // pred_check
      _
    $region47: #{tpu_custom_call.1} parent=1 // pred_check_branch
      %370 = sbr.rel (0) target = $region49
    $region48: #{tpu_custom_call.1} parent=1 // pred_region
      %371 = dma.done [#allocation4], 256
    $region49: #{tpu_custom_call.1} parent=1 // pred_fallthru
      _
    %372 = vsyncpa [#allocation3], 1
    %373 = vsyncpa [#allocation6], 1
    %374 = vsyncpa [#allocation4], 1

</llo_original>
